<compile_context>
chip_gen: v7x
topology: tpu7x:2x2x1
jax: 0.10.0
libtpu: 0.0.40
codegen_flags: <defaults>
</compile_context>

<pallas_src>
import jax
import jax.numpy as jnp
from jax.experimental import pallas as pl
from jax.experimental.pallas import tpu as pltpu


# ---------------------------------------------------------------------------
# Kernels
# ---------------------------------------------------------------------------

def _patches_in_block_kernel(img_ref, adv_ref, out_ref):
    # img_ref: (s_tile, L)   adv_ref: (N, s_tile, L)   out_ref: (s_tile, L)
    out = img_ref[...]
    n_patches = adv_ref.shape[0]
    for n in range(n_patches):                      # N small & static: unrolled
        adv = adv_ref[n]                            # native adv dtype
        out = jnp.where(adv == 0, out, adv.astype(out.dtype))
    out_ref[...] = out


def _patch_on_grid_kernel(img_ref, adv_ref, out_ref):
    # img_ref/out_ref: (s_tile, L)   adv_ref: (s_tile, L), one patch plane.
    # Output block index is constant across the trailing "arbitrary" n axis,
    # so out_ref stays resident in VMEM and acts as the running accumulator.
    n = pl.program_id(2)

    @pl.when(n == 0)
    def _():
        out_ref[...] = img_ref[...]

    adv = adv_ref[...]
    cur = out_ref[...]
    out_ref[...] = jnp.where(adv == 0, cur, adv.astype(cur.dtype))


# ---------------------------------------------------------------------------
# Tiling selection
# ---------------------------------------------------------------------------

def _sublane_align(dtype):
    # 32-bit rows pack 8/vreg, bf16 16/vreg, int8/fp8 32/vreg.
    return max(8, 32 // jnp.dtype(dtype).itemsize)


def _vmem_budget():
    """Generation-aware (working-set budget, scoped-VMEM limit) in bytes."""
    try:
        phys = pltpu.get_tpu_info().vmem_capacity_bytes
    except Exception:
        phys = 64 * 1024 * 1024                      # conservative (v7x-sized)
    if phys >= 96 * 1024 * 1024:                     # v5e / v6e: 128 MiB physical
        return 48 * 1024 * 1024, 64 * 1024 * 1024
    return 24 * 1024 * 1024, 32 * 1024 * 1024        # v7x: 64 MiB physical


def _choose_layout(M, B, N, img_itemsize, adv_itemsize, sub_align,
                   budget_bytes, patch_on_grid):
    """Split M = S * L (L lane-dense) and pick s_tile | S, maximizing the
    double-buffered per-step block under the VMEM budget.

    Returns (L, S, s_tile, fits_budget)."""
    if patch_on_grid:
        per_elem = 2 * (2 * img_itemsize + adv_itemsize)        # img, out, 1 adv
    else:
        per_elem = 2 * (2 * img_itemsize + N * adv_itemsize)    # img, out, N adv

    lane_cands = [c for c in range(128, M + 1, 128) if M % c == 0] or [M]

    best, best_key = None, None
    for L in lane_cands:
        S = M // L
        row_cands = {S}                               # full dim is always legal
        row_cands.update(t for t in range(sub_align, S + 1, sub_align)
                         if S % t == 0)
        for s_tile in sorted(row_cands):
            blk = per_elem * s_tile * L
            fits = blk <= budget_bytes
            par_cells = B * (S // s_tile)             # megacore-shardable cells
            aligned = (s_tile % sub_align == 0) or (s_tile == S)
            key = (fits,                              # must fit the budget
                   par_cells >= 2,                    # keep both v7x TCs busy
                   L % 128 == 0,                      # lane-dense
                   aligned,                           # sublane-aligned rows
                   blk if fits else -blk)             # biggest fitting block
            if best_key is None or key > best_key:
                best_key, best = key, (L, S, s_tile, fits)
    return best


# ---------------------------------------------------------------------------
# Wrapper
# ---------------------------------------------------------------------------

def patch_applier(img_batch, adv_batch, *, alias_image_output=False):
    """img_batch: (B, C, H, W); adv_batch: (B, N, C, H, W). Returns (B, C, H, W)."""
    B, C, H, W = img_batch.shape
    Bn, N, Cn, Hn, Wn = adv_batch.shape
    assert (B, C, H, W) == (Bn, Cn, Hn, Wn)

    if N == 0:
        return img_batch

    M = C * H * W
    img_item = jnp.dtype(img_batch.dtype).itemsize
    adv_item = jnp.dtype(adv_batch.dtype).itemsize
    sub_align = max(_sublane_align(img_batch.dtype), _sublane_align(adv_batch.dtype))

    budget_bytes, vmem_limit_bytes = _vmem_budget()

    # Strategy: few patches -> pack all N planes into the block (one grid step
    # per tile).  Many patches (or collapsed tiles) -> patch axis on the grid
    # as a trailing "arbitrary" dimension with the output block resident.
    use_patch_grid = N >= 8
    L, S, s_tile, fits = _choose_layout(
        M, B, N, img_item, adv_item, sub_align, budget_bytes,
        patch_on_grid=use_patch_grid)
    if not use_patch_grid and N > 1:
        img_tile_bytes = s_tile * L * img_item
        if (not fits) or img_tile_bytes < (1 << 20):
            Lg, Sg, sg, fits_g = _choose_layout(
                M, B, N, img_item, adv_item, sub_align, budget_bytes,
                patch_on_grid=True)
            if fits_g and (not fits or sg * Lg * img_item > img_tile_bytes):
                use_patch_grid = True
                L, S, s_tile, fits = Lg, Sg, sg, fits_g

    # Free, contiguous (B-major) reshapes -- no transpose, no dtype cast.
    img3d = img_batch.reshape(B, S, L)
    adv4d = adv_batch.reshape(B, N, S, L)

    cost = pl.CostEstimate(
        flops=2 * B * N * M,
        transcendentals=0,
        bytes_accessed=2 * B * M * img_item + B * N * M * adv_item)

    call_kwargs = {}
    if alias_image_output:
        # Only beneficial when the caller donates img_batch.
        call_kwargs["input_output_aliases"] = {0: 0}

    if use_patch_grid:
        grid = (B, S // s_tile, N)
        in_specs = [
            pl.BlockSpec((None, s_tile, L), lambda b, s, n: (b, s, 0)),
            pl.BlockSpec((None, None, s_tile, L), lambda b, s, n: (b, n, s, 0)),
        ]
        out_specs = pl.BlockSpec((None, s_tile, L), lambda b, s, n: (b, s, 0))
        kernel = _patch_on_grid_kernel
        dim_sem = ("parallel", "parallel", "arbitrary")
    else:
        grid = (B, S // s_tile)
        in_specs = [
            pl.BlockSpec((None, s_tile, L), lambda b, s: (b, s, 0)),
            pl.BlockSpec((None, N, s_tile, L), lambda b, s: (b, 0, s, 0)),
        ]
        out_specs = pl.BlockSpec((None, s_tile, L), lambda b, s: (b, s, 0))
        kernel = _patches_in_block_kernel
        dim_sem = ("parallel", "parallel")

    out3d = pl.pallas_call(
        kernel,
        out_shape=jax.ShapeDtypeStruct((B, S, L), img_batch.dtype),
        grid_spec=pltpu.PrefetchScalarGridSpec(
            num_scalar_prefetch=0,
            grid=grid,
            in_specs=in_specs,
            out_specs=out_specs,
        ),
        compiler_params=pltpu.CompilerParams(
            dimension_semantics=dim_sem,
            vmem_limit_bytes=vmem_limit_bytes,
        ),
        cost_estimate=cost,
        **call_kwargs,
    )(img3d, adv4d)

    return out3d.reshape(B, C, H, W)


# ---------------------------------------------------------------------------
# Reference & tests
# ---------------------------------------------------------------------------

def _reference(img_batch, adv_batch):
    # Pure-JAX mirror of the PyTorch loop (output keeps the image dtype).
    out = img_batch
    for n in range(adv_batch.shape[1]):
        adv = adv_batch[:, n]
        out = jnp.where(adv == 0, out, adv.astype(out.dtype))
    return out


def _run_case(key, B, N, C, H, W, dtype=jnp.float32):
    k_img, k_adv, k_mask = jax.random.split(key, 3)
    img_batch = jax.random.uniform(k_img, (B, C, H, W), dtype=dtype)

    # Patches that are exactly zero outside their region ("adv == 0" => keep image).
    adv_vals = jax.random.uniform(k_adv, (B, N, C, H, W), dtype=dtype) + jnp.asarray(0.1, dtype)
    mask = (jax.random.uniform(k_mask, (B, N, 1, H, W)) > 0.5).astype(dtype)
    adv_batch = adv_vals * mask

    out = patch_applier(img_batch, adv_batch)
    out = jax.block_until_ready(out)

    ref = _reference(img_batch, adv_batch)
    assert out.shape == img_batch.shape
    assert out.dtype == img_batch.dtype
    assert jnp.allclose(out, ref), f"mismatch vs reference for shape {(B, N, C, H, W)}"


if __name__ == "__main__":
    key = jax.random.PRNGKey(0)
    k1, k2, k3, k4 = jax.random.split(key, 4)

    # Case 1: small shape, patches packed into the block (S = 1, full-L block).
    _run_case(k1, B=2, N=3, C=3, H=16, W=16)

    # Case 2: sublane-aligned in-block layout.
    _run_case(k2, B=2, N=2, C=4, H=32, W=32)

    # Case 3: many patches -> patch axis on the grid ("arbitrary" reduction axis).
    _run_case(k3, B=2, N=9, C=3, H=16, W=16)

    # Case 4: bf16 (dtype-aware sublane alignment) + B=1 (grid still >= 2 cells).
    _run_case(k4, B=1, N=2, C=4, H=32, W=32, dtype=jnp.bfloat16)

    print("KERNEL_OK")
</pallas_src>

<mosaic_0001>
module attributes {stable_mosaic.version = 11 : i64} {
  func.func @_patches_in_block_kernel(%arg0: i32, %arg1: i32, %arg2: memref<1x6x128xf32, #tpu.memory_space<vmem>>, %arg3: memref<1x3x6x128xf32, #tpu.memory_space<vmem>>, %arg4: memref<1x6x128xf32, #tpu.memory_space<vmem>>) attributes {dimension_semantics = [#tpu.dimension_semantics<parallel>, #tpu.dimension_semantics<parallel>], iteration_bounds = array<i64: 2, 1>, scalar_prefetch = 0 : i64, scratch_operands = 0 : i64, tpu.core_type = #tpu.core_type<tc>, window_params = [{transform_indices = @transform_0, window_bounds = array<i64: 1, 6, 128>}, {transform_indices = @transform_1, window_bounds = array<i64: 1, 3, 6, 128>}, {transform_indices = @transform_2, window_bounds = array<i64: 1, 6, 128>}]} {
    %c0 = arith.constant 0 : index
    %c0_0 = arith.constant 0 : index
    %c0_1 = arith.constant 0 : index
    %0 = vector.load %arg2[%c0, %c0_0, %c0_1] : memref<1x6x128xf32, #tpu.memory_space<vmem>>, vector<1x6x128xf32>
    %1 = vector.shape_cast %0 : vector<1x6x128xf32> to vector<6x128xf32>
    %c0_2 = arith.constant 0 : index
    %c0_3 = arith.constant 0 : index
    %c0_4 = arith.constant 0 : index
    %c0_5 = arith.constant 0 : index
    %2 = vector.load %arg3[%c0_2, %c0_3, %c0_4, %c0_5] : memref<1x3x6x128xf32, #tpu.memory_space<vmem>>, vector<1x1x6x128xf32>
    %3 = vector.shape_cast %2 : vector<1x1x6x128xf32> to vector<6x128xf32>
    %cst = arith.constant 0.000000e+00 : f32
    %4 = vector.broadcast %cst : f32 to vector<6x128xf32>
    %5 = arith.cmpf oeq, %3, %4 : vector<6x128xf32>
    %6 = arith.select %5, %1, %3 : vector<6x128xi1>, vector<6x128xf32>
    %c0_6 = arith.constant 0 : index
    %c1 = arith.constant 1 : index
    %c0_7 = arith.constant 0 : index
    %c0_8 = arith.constant 0 : index
    %7 = vector.load %arg3[%c0_6, %c1, %c0_7, %c0_8] : memref<1x3x6x128xf32, #tpu.memory_space<vmem>>, vector<1x1x6x128xf32>
    %8 = vector.shape_cast %7 : vector<1x1x6x128xf32> to vector<6x128xf32>
    %cst_9 = arith.constant 0.000000e+00 : f32
    %9 = vector.broadcast %cst_9 : f32 to vector<6x128xf32>
    %10 = arith.cmpf oeq, %8, %9 : vector<6x128xf32>
    %11 = arith.select %10, %6, %8 : vector<6x128xi1>, vector<6x128xf32>
    %c0_10 = arith.constant 0 : index
    %c2 = arith.constant 2 : index
    %c0_11 = arith.constant 0 : index
    %c0_12 = arith.constant 0 : index
    %12 = vector.load %arg3[%c0_10, %c2, %c0_11, %c0_12] : memref<1x3x6x128xf32, #tpu.memory_space<vmem>>, vector<1x1x6x128xf32>
    %13 = vector.shape_cast %12 : vector<1x1x6x128xf32> to vector<6x128xf32>
    %cst_13 = arith.constant 0.000000e+00 : f32
    %14 = vector.broadcast %cst_13 : f32 to vector<6x128xf32>
    %15 = arith.cmpf oeq, %13, %14 : vector<6x128xf32>
    %16 = arith.select %15, %11, %13 : vector<6x128xi1>, vector<6x128xf32>
    %c0_14 = arith.constant 0 : index
    %c0_15 = arith.constant 0 : index
    %c0_16 = arith.constant 0 : index
    %17 = vector.load %arg4[%c0_14, %c0_15, %c0_16] : memref<1x6x128xf32, #tpu.memory_space<vmem>>, vector<1x6x128xf32>
    %18 = vector.shape_cast %17 : vector<1x6x128xf32> to vector<6x128xf32>
    %19 = vector.shape_cast %16 : vector<6x128xf32> to vector<1x6x128xf32>
    tpu.vector_store %arg4[%c0_14, %c0_15, %c0_16], %19 {strides = array<i32>} : memref<1x6x128xf32, #tpu.memory_space<vmem>>, vector<1x6x128xf32>,
    return
  }
  func.func @transform_0(%arg0: i32, %arg1: i32) -> (i32, i32, i32) {
    %c0_i32 = arith.constant 0 : i32
    %c0_i32_0 = arith.constant 0 : i32
    return %arg0, %arg1, %c0_i32 : i32, i32, i32
  }
  func.func @transform_1(%arg0: i32, %arg1: i32) -> (i32, i32, i32, i32) {
    %c0_i32 = arith.constant 0 : i32
    %c0_i32_0 = arith.constant 0 : i32
    %c0_i32_1 = arith.constant 0 : i32
    return %arg0, %c0_i32, %arg1, %c0_i32_0 : i32, i32, i32, i32
  }
  func.func @transform_2(%arg0: i32, %arg1: i32) -> (i32, i32, i32) {
    %c0_i32 = arith.constant 0 : i32
    %c0_i32_0 = arith.constant 0 : i32
    return %arg0, %arg1, %c0_i32 : i32, i32, i32
  }
}

</mosaic_0001>

<llo_original>
// kernel: tpu_custom_call.1
$region0: #{tpu_custom_call.1}
  #allocation0 [shape = 'u32[]', space=smem, size = 0x4, offset = 0x4, fixed_abs, tag = 'smem constant byte address 0x4 - core index']
  #allocation1 [shape = 'u32[144,128]{1,0:T(1,128)}', space=vmem, size = 0x12000, scoped, tag = 'internal scratch']
  %s0 = inlined_call_operand.vmem [shape: f32[2,6,128], index: 0, kind: input, shape index: {}]
  %s1 = inlined_call_operand.vmem [shape: f32[2,3,6,128], index: 1, kind: input, shape index: {}]
  %s2 = inlined_call_operand.vmem [shape: f32[2,6,128], index: 2, kind: output, shape index: {}]
  %s3 = sld [smem:[#allocation0]]
  $region41: #{tpu_custom_call.1} parent=0
    _
  %s5 = ssub.s32 1, %s3
  %s6 = scalar_select 0, %s5, %s3
  loop: start=0, step=1, limit=4
  $region2: #{tpu_custom_call.1} parent=0 // loop_pre_header
    _
  $region3: #{tpu_custom_call.1} parent=0 // loop_header
    %s8 = sphi 0, %s12
    %p9 = scmp.ge.s32.totalorder %s8, 4
    %s15 = sphi 0, %s27
    %s16 = sphi 0, %s23
    %s17 = sphi 0, %s15
    %s18 = sphi 0, %s16
    %s19 = sphi 0, %s17
    %s20 = sphi 0, %s18
    %s32 = sphi 0, %s34
    %s35 = sphi 0, %s32
    %s36 = sphi 0, %s35
    %s52 = sphi 0, %s36
    %s60 = sphi 0, %s62
    %s63 = sphi 0, %s60
    %s64 = sphi 0, %s63
    %s80 = sphi 0, %s64
    %s88 = sphi 0, %s90
    %s91 = sphi 0, %s88
    %s92 = sphi 0, %s91
    %s108 = sphi 0, %s92
  $region4: #{tpu_custom_call.1} parent=0 // loop_header_branch
    %11 = sbr.rel (%p9) target = $region8
  $region5: #{tpu_custom_call.1} parent=0 // loop_body
    %s13 = ssub.s32 %s8, 1
    %s14 = ssub.s32 %s8, 2
    %s21 = sadd.s32 1, %s16
    %p22 = scmp.ge.s32.totalorder %s21, 1
    %s23 = scalar_select %p22, 0, %s21
    %s24 = sadd.s32 1, %s15
    %s25 = scalar_select %p22, %s24, %s15
    %p26 = scmp.ge.s32.totalorder %s25, 2
    %s27 = scalar_select %p26, 0, %s25
    %s28 = ssub.s32 %s15, %s27
    %s29 = ssub.s32 %s16, %s23
    %s30 = sor.u32 %s28, %s29
    %p31 = scmp.eq.s32.totalorder %s30, 0
    %s33 = sadd.s32 %s32, 1
    %s34 = scalar_select %p31, %s32, %s33
    %p37 = pneg %p31
    %p38 = scmp.eq.s32.totalorder %s8, 1
    %p39 = por %p37, %p38
    %p40 = scmp.ne.s32.totalorder %s32, %s35
    %p41 = scmp.eq.s32.totalorder %s8, 0
    %p42 = por %p40, %p41
    %p43 = scmp.ne.s32.totalorder %s32, %s35
    %p44 = scmp.eq.s32.totalorder %s13, 1
    %p45 = por %p43, %p44
    %p46 = scmp.ne.s32.totalorder %s35, %s36
    %p47 = scmp.eq.s32.totalorder %s13, 0
    %p48 = por %p46, %p47
    %p49 = scmp.ne.s32.totalorder %s35, %s36
    %p50 = scmp.eq.s32.totalorder %s14, 1
    %p51 = por %p49, %p50
    %p53 = scmp.ne.s32.totalorder %s36, %s52
    %p54 = scmp.eq.s32.totalorder %s14, 0
    %p55 = por %p53, %p54
    %s56 = ssub.s32 %s15, %s27
    %s57 = ssub.s32 %s16, %s23
    %s58 = sor.u32 %s56, %s57
    %p59 = scmp.eq.s32.totalorder %s58, 0
    %s61 = sadd.s32 %s60, 1
    %s62 = scalar_select %p59, %s60, %s61
    %p65 = pneg %p59
    %p66 = scmp.eq.s32.totalorder %s8, 1
    %p67 = por %p65, %p66
    %p68 = scmp.ne.s32.totalorder %s60, %s63
    %p69 = scmp.eq.s32.totalorder %s8, 0
    %p70 = por %p68, %p69
    %p71 = scmp.ne.s32.totalorder %s60, %s63
    %p72 = scmp.eq.s32.totalorder %s13, 1
    %p73 = por %p71, %p72
    %p74 = scmp.ne.s32.totalorder %s63, %s64
    %p75 = scmp.eq.s32.totalorder %s13, 0
    %p76 = por %p74, %p75
    %p77 = scmp.ne.s32.totalorder %s63, %s64
    %p78 = scmp.eq.s32.totalorder %s14, 1
    %p79 = por %p77, %p78
    %p81 = scmp.ne.s32.totalorder %s64, %s80
    %p82 = scmp.eq.s32.totalorder %s14, 0
    %p83 = por %p81, %p82
    %s84 = ssub.s32 %s15, %s27
    %s85 = ssub.s32 %s16, %s23
    %s86 = sor.u32 %s84, %s85
    %p87 = scmp.eq.s32.totalorder %s86, 0
    %s89 = sadd.s32 %s88, 1
    %s90 = scalar_select %p87, %s88, %s89
    %p93 = pneg %p87
    %p94 = scmp.eq.s32.totalorder %s8, 1
    %p95 = por %p93, %p94
    %p96 = scmp.ne.s32.totalorder %s88, %s91
    %p97 = scmp.eq.s32.totalorder %s8, 0
    %p98 = por %p96, %p97
    %p99 = scmp.ne.s32.totalorder %s88, %s91
    %p100 = scmp.eq.s32.totalorder %s13, 1
    %p101 = por %p99, %p100
    %p102 = scmp.ne.s32.totalorder %s91, %s92
    %p103 = scmp.eq.s32.totalorder %s13, 0
    %p104 = por %p102, %p103
    %p105 = scmp.ne.s32.totalorder %s91, %s92
    %p106 = scmp.eq.s32.totalorder %s14, 1
    %p107 = por %p105, %p106
    %p109 = scmp.ne.s32.totalorder %s92, %s108
    %p110 = scmp.eq.s32.totalorder %s14, 0
    %p111 = por %p109, %p110
    %p112 = scmp.le.s32.totalorder 1, %s8
    %p113 = scmp.lt.s32.totalorder %s8, 3
    %p114 = pnand %p112, %p113
    %p115 = pneg %p114
    // Predicated region
    $region9: #{tpu_custom_call.1} parent=5 // pred_check
      _
    $region10: #{tpu_custom_call.1} parent=5 // pred_check_branch
      %117 = sbr.rel (%p114) target = $region12
    $region11: #{tpu_custom_call.1} parent=5 // pred_region
      %s118 = ssub.s32 %s8, 1
    $region12: #{tpu_custom_call.1} parent=5 // pred_fallthru
      _
    %p119 = scmp.lt.s32.totalorder %s8, 2
    // Predicated region
    $region13: #{tpu_custom_call.1} parent=5 // pred_check
      %p120 = pneg %p119
    $region14: #{tpu_custom_call.1} parent=5 // pred_check_branch
      %122 = sbr.rel (%p120) target = $region16
    $region15: #{tpu_custom_call.1} parent=5 // pred_region
      // Predicated region
      $region17: #{tpu_custom_call.1} parent=15 // pred_check
        %p123 = pneg %p42
      $region18: #{tpu_custom_call.1} parent=15 // pred_check_branch
        %125 = sbr.rel (%p123) target = $region20
      $region19: #{tpu_custom_call.1} parent=15 // pred_region
        %p126 = scmp.lt.s32.totalorder %s15, 1
        %s127 = scalar_select %p126, %s15, 1
        %p128 = scmp.lt.s32.totalorder %s16, 0
        %s129 = scalar_select %p128, %s16, 0
        %s130 = sadd.s32 %s129, %s127
        %s131 = smul.addr %s130, 8
        %s132 = scalar_lea.vmem %s0, %s131
      $region20: #{tpu_custom_call.1} parent=15 // pred_fallthru
        _
      // Predicated region
      $region21: #{tpu_custom_call.1} parent=15 // pred_check
        %p133 = pneg %p70
      $region22: #{tpu_custom_call.1} parent=15 // pred_check_branch
        %135 = sbr.rel (%p133) target = $region24
      $region23: #{tpu_custom_call.1} parent=15 // pred_region
        %p136 = scmp.lt.s32.totalorder %s15, 1
        %s137 = scalar_select %p136, %s15, 1
        %p138 = scmp.lt.s32.totalorder %s16, 0
        %s139 = scalar_select %p138, %s16, 0
        %s140 = smul.addr %s137, 3
        %s141 = sadd.s32 %s139, %s140
        %s142 = smul.addr %s141, 8
        %s143 = scalar_lea.vmem %s1, %s142
      $region24: #{tpu_custom_call.1} parent=15 // pred_fallthru
        _
    $region16: #{tpu_custom_call.1} parent=5 // pred_fallthru
      _
    %p144 = scmp.le.s32.totalorder 1, %s8
    %p145 = scmp.lt.s32.totalorder %s8, 3
    %p146 = pnand %p144, %p145
    %p147 = pneg %p146
    // Predicated region
    $region25: #{tpu_custom_call.1} parent=5 // pred_check
      _
    $region26: #{tpu_custom_call.1} parent=5 // pred_check_branch
      %149 = sbr.rel (%p146) target = $region28
    $region27: #{tpu_custom_call.1} parent=5 // pred_region
      %s150 = ssub.s32 %s8, 1
      %p151 = scmp.lt.s32.totalorder %s17, 1
      %s152 = scalar_select %p151, %s17, 1
      %p153 = scmp.lt.s32.totalorder %s18, 0
      %s154 = scalar_select %p153, %s18, 0
      %s155 = sadd.s32 %s154, %s152
      %s156 = smul.addr %s155, 8
      %s157 = scalar_lea.vmem %s0, %s156
      %p158 = pneg %p48
      %p159 = pneg %p45
      %p160 = scmp.lt.s32.totalorder %s17, 1
      %s161 = scalar_select %p160, %s17, 1
      %p162 = scmp.lt.s32.totalorder %s18, 0
      %s163 = scalar_select %p162, %s18, 0
      %s164 = smul.addr %s161, 3
      %s165 = sadd.s32 %s163, %s164
      %s166 = smul.addr %s165, 8
      %s167 = scalar_lea.vmem %s1, %s166
      %p168 = pneg %p76
      %p169 = pneg %p73
      %p170 = pneg %p104
      %p171 = pneg %p101
      %p172 = scmp.lt.s32.totalorder %s17, 1
      %s173 = scalar_select %p172, %s17, 1
      %p174 = scmp.lt.s32.totalorder %s18, 0
      %s175 = scalar_select %p174, %s18, 0
      %s176 = sadd.s32 %s175, %s173
      %s177 = smul.addr %s176, 8
      %s178 = scalar_lea.vmem %s2, %s177
      %p179 = scmp.lt.s32.totalorder %s17, 1
      %s180 = scalar_select %p179, %s17, 1
      %p181 = scmp.lt.s32.totalorder %s18, 0
      %s182 = scalar_select %p181, %s18, 0
      %s183 = sadd.s32 %s182, %s180
      %s184 = smul.addr %s183, 8
      %s185 = scalar_lea.vmem %s0, %s184
      %p186 = scmp.lt.s32.totalorder %s17, 1
      %s187 = scalar_select %p186, %s17, 1
      %p188 = scmp.lt.s32.totalorder %s18, 0
      %s189 = scalar_select %p188, %s18, 0
      %s190 = smul.addr %s187, 3
      %s191 = sadd.s32 %s189, %s190
      %s192 = smul.addr %s191, 8
      %s193 = scalar_lea.vmem %s1, %s192
      %p194 = scmp.lt.s32.totalorder %s17, 1
      %s195 = scalar_select %p194, %s17, 1
      %p196 = scmp.lt.s32.totalorder %s18, 0
      %s197 = scalar_select %p196, %s18, 0
      %s198 = sadd.s32 %s197, %s195
      %s199 = smul.addr %s198, 8
      %s200 = scalar_lea.vmem %s2, %s199
      %v201 = vld [vmem:[%s185] sm:$0x3f]
      %v202 = vld [vmem:[%s193] sm:$0x3f]
      %vm203 = vcmp.eq.f32.partialorder %v202, 0.0
      %v204 = vsel %vm203, %v201, %v202
      %s205 = scalar_lea.vmem %s193, 8
      %v206 = vld [vmem:[%s205] sm:$0x3f]
      %vm207 = vcmp.eq.f32.partialorder %v206, 0.0
      %v208 = vsel %vm207, %v204, %v206
      %s209 = scalar_lea.vmem %s193, 16
      %v210 = vld [vmem:[%s209] sm:$0x3f]
      %vm211 = vcmp.eq.f32.partialorder %v210, 0.0
      %v212 = vsel %vm211, %v208, %v210
      %213 = vst [vmem:[%s200] sm:$0x3f] %v212
      %p214 = scmp.lt.s32.totalorder %s17, 1
      %s215 = scalar_select %p214, %s17, 1
      %p216 = scmp.lt.s32.totalorder %s18, 0
      %s217 = scalar_select %p216, %s18, 0
      %s218 = sadd.s32 %s217, %s215
      %s219 = smul.addr %s218, 8
      %s220 = scalar_lea.vmem %s2, %s219
      // Predicated region
      $region29: #{tpu_custom_call.1} parent=27 // pred_check
        %p221 = pneg %p101
      $region30: #{tpu_custom_call.1} parent=27 // pred_check_branch
        %223 = sbr.rel (%p221) target = $region32
      $region31: #{tpu_custom_call.1} parent=27 // pred_region
        _
      $region32: #{tpu_custom_call.1} parent=27 // pred_fallthru
        _
    $region28: #{tpu_custom_call.1} parent=5 // pred_fallthru
      _
    %p224 = scmp.le.s32.totalorder 2, %s8
    // Predicated region
    $region33: #{tpu_custom_call.1} parent=5 // pred_check
      %p225 = pneg %p224
    $region34: #{tpu_custom_call.1} parent=5 // pred_check_branch
      %227 = sbr.rel (%p225) target = $region36
    $region35: #{tpu_custom_call.1} parent=5 // pred_region
      %s228 = ssub.s32 %s8, 2
      // Predicated region
      $region37: #{tpu_custom_call.1} parent=35 // pred_check
        %p229 = pneg %p107
      $region38: #{tpu_custom_call.1} parent=35 // pred_check_branch
        %231 = sbr.rel (%p229) target = $region40
      $region39: #{tpu_custom_call.1} parent=35 // pred_region
        %p232 = scmp.lt.s32.totalorder %s19, 1
        %s233 = scalar_select %p232, %s19, 1
        %p234 = scmp.lt.s32.totalorder %s20, 0
        %s235 = scalar_select %p234, %s20, 0
        %s236 = sadd.s32 %s235, %s233
        %s237 = smul.addr %s236, 8
        %s238 = scalar_lea.vmem %s2, %s237
      $region40: #{tpu_custom_call.1} parent=35 // pred_fallthru
        _
    $region36: #{tpu_custom_call.1} parent=5 // pred_fallthru
      _
  $region6: #{tpu_custom_call.1} parent=0 // loop_footer
    %s12 = sadd.s32 1, %s8
  $region7: #{tpu_custom_call.1} parent=0 // loop_footer_branch
    %7 = sbr.rel target = $region3
  $region8: #{tpu_custom_call.1} parent=0 // loop_exit
    _

</llo_original>
